<compile_context>
chip_gen: v6e
topology: v6e:2x2x1
jax: 0.10.0
libtpu: 0.0.40
codegen_flags: <defaults>
</compile_context>

<pallas_src>
import jax
import jax.numpy as jnp
from jax import lax
from jax.experimental import pallas as pl
from jax.experimental.pallas import tpu as pltpu


def policy_net_kernel(x_ref, w1_ref, b1_ref, w2_ref, b2_ref, o_ref):
    # x_ref: (TB, nS)   w1_ref: (nH, nS)   b1_ref: (nH, 1)
    # w2_ref: (nA, nH)  b2_ref: (nA, 1)    o_ref: (nA, TB)   -- TB on lanes.

    # ---- hidden layer: h^T = relu(W1 @ x^T + b1) -> (nH, TB) -------------
    # Contract the nS axis of both operands (A @ B^T form, MXU-native).
    h = lax.dot_general(
        w1_ref[...], x_ref[...],
        dimension_numbers=(((1,), (1,)), ((), ())),
        preferred_element_type=jnp.float32)
    h = jnp.maximum(h + b1_ref[...], 0.0)          # (nH, TB) + (nH, 1)

    # ---- output layer: logits^T = W2 @ h^T + b2 -> (nA, TB) --------------
    logits = jnp.dot(w2_ref[...], h, preferred_element_type=jnp.float32)
    logits = logits + b2_ref[...]                  # (nA, TB) + (nA, 1)

    # ---- softmax over actions (sublane axis 0), numerically stable -------
    m = jnp.max(logits, axis=0, keepdims=True)     # (1, TB)
    e = jnp.exp(logits - m)                        # (nA, TB)
    denom = jnp.sum(e, axis=0, keepdims=True)      # (1, TB)
    # Exact divide: rows sum to 1 to f32 rounding (approx reciprocal biased
    # the normalization by ~1e-3 and is not needed once lane-dense).
    o_ref[...] = (e / denom).astype(o_ref.dtype)


def policy_net_forward_t(x, w1, b1, w2, b2, *, tile_b=8192):
    """Fast path. x: (B, nS) f32 -> (nA, B) f32 action probabilities.

    Output is kept TRANSPOSED (actions on sublanes, batch on lanes) so the
    kernel's stores are full-lane and no wrapper-side transpose re-adds HBM
    traffic.  Consume it as probs[:, i] per state / probs.T only if you must.
    """
    B, nS = x.shape
    nH = w1.shape[0]
    nA = w2.shape[0]

    if B <= tile_b:
        # Single tile: blocks equal the full array dims (exempt from (8,128)).
        tb = B
    else:
        # Multi-tile: tb is the lane extent of the output block -> must be a
        # multiple of 128 (it is also a multiple of 8 for the x block).
        assert tile_b % 128 == 0, "tile_b must be a multiple of 128"
        tb = tile_b
    num_tiles = pl.cdiv(B, tb)   # ragged trailing block handled by masking

    return pl.pallas_call(
        policy_net_kernel,
        out_shape=jax.ShapeDtypeStruct((nA, B), jnp.float32),
        grid=(num_tiles,),
        in_specs=[
            pl.BlockSpec((tb, nS), lambda i: (i, 0)),   # batch tile of states
            pl.BlockSpec((nH, nS), lambda i: (0, 0)),   # W1: VMEM-resident
            pl.BlockSpec((nH, 1), lambda i: (0, 0)),    # b1: VMEM-resident
            pl.BlockSpec((nA, nH), lambda i: (0, 0)),   # W2: VMEM-resident
            pl.BlockSpec((nA, 1), lambda i: (0, 0)),    # b2: VMEM-resident
        ],
        out_specs=pl.BlockSpec((nA, tb), lambda i: (0, i)),  # lane-dense store
        compiler_params=pltpu.CompilerParams(
            dimension_semantics=("parallel",)),
    )(x, w1, b1, w2, b2)


def policy_net_forward(x, w1, b1, w2, b2, *, tile_b=8192):
    """Module-semantics wrapper: returns (B, nA) like the PyTorch forward.

    The transpose back is a separate XLA op with HBM traffic comparable to
    the kernel's output traffic; prefer policy_net_forward_t in hot paths.
    """
    return policy_net_forward_t(x, w1, b1, w2, b2, tile_b=tile_b).T


def init_params(key, nS, nH, nA):
    """nn.Linear-style init, in PyTorch weight layout (out, in) / bias (out, 1)."""
    k1, k2, k3, k4 = jax.random.split(key, 4)
    lim1 = 1.0 / (nS ** 0.5)
    lim2 = 1.0 / (nH ** 0.5)
    w1 = jax.random.uniform(k1, (nH, nS), jnp.float32, -lim1, lim1)
    b1 = jax.random.uniform(k2, (nH, 1), jnp.float32, -lim1, lim1)
    w2 = jax.random.uniform(k3, (nA, nH), jnp.float32, -lim2, lim2)
    b2 = jax.random.uniform(k4, (nA, 1), jnp.float32, -lim2, lim2)
    return w1, b1, w2, b2


def reference_forward(x, w1, b1, w2, b2):
    h = jnp.maximum(x @ w1.T + b1[:, 0], 0.0)
    logits = h @ w2.T + b2[:, 0]
    return jax.nn.softmax(logits, axis=1)


if __name__ == "__main__":
    # Shapes consistent with the module: nS=16 state dims, nH=32 hidden, nA=8 actions.
    nS, nH, nA = 16, 32, 8

    key = jax.random.PRNGKey(0)
    k_x1, k_x2, k_p = jax.random.split(key, 3)
    w1, b1, w2, b2 = init_params(k_p, nS, nH, nA)

    # --- case 1: tiny batch, single tile, module-shaped (B, nA) output ----
    B_small = 8
    x_small = jax.random.normal(k_x1, (B_small, nS), jnp.float32)
    out_small = jax.block_until_ready(policy_net_forward(x_small, w1, b1, w2, b2))
    ref_small = reference_forward(x_small, w1, b1, w2, b2)
    assert out_small.shape == (B_small, nA)
    assert jnp.allclose(out_small, ref_small, atol=2e-3, rtol=2e-3)
    # Exact normalization -> rows sum to 1 to f32 rounding.
    assert jnp.allclose(jnp.sum(out_small, axis=1), jnp.ones((B_small,)), atol=1e-4)

    # --- case 2: multi-tile grid with ragged trailing block (no jnp.pad), --
    # --- lane-dense transposed output consumed directly. ------------------
    B_big = 300                       # not a multiple of the tile
    x_big = jax.random.normal(k_x2, (B_big, nS), jnp.float32)
    out_big = jax.block_until_ready(
        policy_net_forward_t(x_big, w1, b1, w2, b2, tile_b=128))
    ref_big = reference_forward(x_big, w1, b1, w2, b2)
    assert out_big.shape == (nA, B_big)
    assert jnp.allclose(out_big, ref_big.T, atol=2e-3, rtol=2e-3)
    assert jnp.allclose(jnp.sum(out_big, axis=0), jnp.ones((B_big,)), atol=1e-4)

    print("KERNEL_OK")
</pallas_src>

<mosaic_0001>
module attributes {stable_mosaic.version = 11 : i64} {
  func.func @policy_net_kernel(%arg0: i32, %arg1: memref<8x16xf32, #tpu.memory_space<vmem>>, %arg2: memref<32x16xf32, #tpu.memory_space<vmem>>, %arg3: memref<32x1xf32, #tpu.memory_space<vmem>>, %arg4: memref<8x32xf32, #tpu.memory_space<vmem>>, %arg5: memref<8x1xf32, #tpu.memory_space<vmem>>, %arg6: memref<8x8xf32, #tpu.memory_space<vmem>>) attributes {dimension_semantics = [#tpu.dimension_semantics<parallel>], iteration_bounds = array<i64: 1>, scalar_prefetch = 0 : i64, scratch_operands = 0 : i64, tpu.core_type = #tpu.core_type<tc>, window_params = [{transform_indices = @transform_0, window_bounds = array<i64: 8, 16>}, {pipeline_mode = #tpu.pipeline_mode<synchronous>, transform_indices = @transform_1, window_bounds = array<i64: 32, 16>}, {pipeline_mode = #tpu.pipeline_mode<synchronous>, transform_indices = @transform_2, window_bounds = array<i64: 32, 1>}, {pipeline_mode = #tpu.pipeline_mode<synchronous>, transform_indices = @transform_3, window_bounds = array<i64: 8, 32>}, {pipeline_mode = #tpu.pipeline_mode<synchronous>, transform_indices = @transform_4, window_bounds = array<i64: 8, 1>}, {transform_indices = @transform_5, window_bounds = array<i64: 8, 8>}]} {
    %c0 = arith.constant 0 : index
    %c0_0 = arith.constant 0 : index
    %0 = vector.load %arg2[%c0, %c0_0] : memref<32x16xf32, #tpu.memory_space<vmem>>, vector<32x16xf32>
    %c0_1 = arith.constant 0 : index
    %c0_2 = arith.constant 0 : index
    %1 = vector.load %arg1[%c0_1, %c0_2] : memref<8x16xf32, #tpu.memory_space<vmem>>, vector<8x16xf32>
    %cst = arith.constant dense<0.000000e+00> : vector<32x8xf32>
    %2 = tpu.matmul %0, %1, %cst {dimension_numbers = #tpu.dot_dimension_numbers<[1], [1], [0], [0], [0, 0, 1, 0], [], []>} : vector<32x16xf32>, vector<8x16xf32>, vector<32x8xf32> -> vector<32x8xf32>
    %c0_3 = arith.constant 0 : index
    %c0_4 = arith.constant 0 : index
    %3 = vector.load %arg3[%c0_3, %c0_4] : memref<32x1xf32, #tpu.memory_space<vmem>>, vector<32x1xf32>
    %4 = vector.broadcast %3 : vector<32x1xf32> to vector<32x8xf32>
    %5 = arith.addf %2, %4 : vector<32x8xf32>
    %cst_5 = arith.constant 0.000000e+00 : f32
    %6 = vector.broadcast %cst_5 : f32 to vector<32x8xf32>
    %7 = arith.maximumf %5, %6 : vector<32x8xf32>
    %c0_6 = arith.constant 0 : index
    %c0_7 = arith.constant 0 : index
    %8 = vector.load %arg4[%c0_6, %c0_7] : memref<8x32xf32, #tpu.memory_space<vmem>>, vector<8x32xf32>
    %cst_8 = arith.constant dense<0.000000e+00> : vector<8x8xf32>
    %9 = tpu.matmul %8, %7, %cst_8 {dimension_numbers = #tpu.dot_dimension_numbers<[1], [0], [0], [1], [0, 0, 1, 1], [], []>} : vector<8x32xf32>, vector<32x8xf32>, vector<8x8xf32> -> vector<8x8xf32>
    %c0_9 = arith.constant 0 : index
    %c0_10 = arith.constant 0 : index
    %10 = vector.load %arg5[%c0_9, %c0_10] : memref<8x1xf32, #tpu.memory_space<vmem>>, vector<8x1xf32>
    %11 = vector.broadcast %10 : vector<8x1xf32> to vector<8x8xf32>
    %12 = arith.addf %9, %11 : vector<8x8xf32>
    %cst_11 = arith.constant dense<0xFF800000> : vector<8xf32>
    %13 = vector.multi_reduction <maximumf>, %12, %cst_11 [0] : vector<8x8xf32> to vector<8xf32>
    %14 = vector.shape_cast %13 : vector<8xf32> to vector<1x8xf32>
    %15 = vector.broadcast %14 : vector<1x8xf32> to vector<8x8xf32>
    %16 = arith.subf %12, %15 : vector<8x8xf32>
    %17 = math.exp %16 : vector<8x8xf32>
    %cst_12 = arith.constant dense<0.000000e+00> : vector<8xf32>
    %18 = vector.multi_reduction <add>, %17, %cst_12 [0] : vector<8x8xf32> to vector<8xf32>
    %19 = vector.shape_cast %18 : vector<8xf32> to vector<1x8xf32>
    %20 = vector.broadcast %19 : vector<1x8xf32> to vector<8x8xf32>
    %21 = arith.divf %17, %20 : vector<8x8xf32>
    %c0_13 = arith.constant 0 : index
    %c0_14 = arith.constant 0 : index
    %22 = vector.load %arg6[%c0_13, %c0_14] : memref<8x8xf32, #tpu.memory_space<vmem>>, vector<8x8xf32>
    tpu.vector_store %arg6[%c0_13, %c0_14], %21 {strides = array<i32>} : memref<8x8xf32, #tpu.memory_space<vmem>>, vector<8x8xf32>,
    return
  }
  func.func @transform_0(%arg0: i32) -> (i32, i32) {
    %c0_i32 = arith.constant 0 : i32
    %c0_i32_0 = arith.constant 0 : i32
    return %arg0, %c0_i32 : i32, i32
  }
  func.func @transform_1(%arg0: i32) -> (i32, i32) {
    %c0_i32 = arith.constant 0 : i32
    %c0_i32_0 = arith.constant 0 : i32
    %c0_i32_1 = arith.constant 0 : i32
    return %c0_i32, %c0_i32_0 : i32, i32
  }
  func.func @transform_2(%arg0: i32) -> (i32, i32) {
    %c0_i32 = arith.constant 0 : i32
    %c0_i32_0 = arith.constant 0 : i32
    %c0_i32_1 = arith.constant 0 : i32
    return %c0_i32, %c0_i32_0 : i32, i32
  }
  func.func @transform_3(%arg0: i32) -> (i32, i32) {
    %c0_i32 = arith.constant 0 : i32
    %c0_i32_0 = arith.constant 0 : i32
    %c0_i32_1 = arith.constant 0 : i32
    return %c0_i32, %c0_i32_0 : i32, i32
  }
  func.func @transform_4(%arg0: i32) -> (i32, i32) {
    %c0_i32 = arith.constant 0 : i32
    %c0_i32_0 = arith.constant 0 : i32
    %c0_i32_1 = arith.constant 0 : i32
    return %c0_i32, %c0_i32_0 : i32, i32
  }
  func.func @transform_5(%arg0: i32) -> (i32, i32) {
    %c0_i32 = arith.constant 0 : i32
    %c0_i32_0 = arith.constant 0 : i32
    return %c0_i32, %arg0 : i32, i32
  }
}

</mosaic_0001>

<llo_original>
// kernel: tpu_custom_call.1
$region0: #{tpu_custom_call.1}
  #allocation0 [shape = 'u32[]', space=smem, size = 0x4, offset = 0x4, fixed_abs, tag = 'smem constant byte address 0x4 - core index']
  #allocation1 [shape = 'u32[144,128]{1,0:T(1,128)}', space=vmem, size = 0x12000, scoped, tag = 'internal scratch']
  %s0 = inlined_call_operand.vmem [shape: f32[8,16], index: 0, kind: input, shape index: {}]
  %s1 = inlined_call_operand.vmem [shape: f32[32,16], index: 1, kind: input, shape index: {}]
  %s2 = inlined_call_operand.vmem [shape: f32[32,1], index: 2, kind: input, shape index: {}]
  %s3 = inlined_call_operand.vmem [shape: f32[8,32], index: 3, kind: input, shape index: {}]
  %s4 = inlined_call_operand.vmem [shape: f32[8,1], index: 4, kind: input, shape index: {}]
  %s5 = inlined_call_operand.hbm [shape: f32[8,8], index: 5, kind: output, shape index: {}]
  %s6 = sld [smem:[#allocation0]]
  $region30: #{tpu_custom_call.1} parent=0
    _
  %s8 = ssub.s32 1, %s6
  %s9 = scalar_select 0, %s8, %s6
  $region1: #{tpu_custom_call.1} parent=0
    #allocation2 [shape = 'u8[4096]{0}', space=vmem, size = 0x1000, scoped, tag = 'output window, operand 0, single buffered']
    #allocation3 [shape = 's32[1]{0}', space=sflag, size = 0x4, scoped, tag = 'scoped memory for tpu_custom_call.1']
    %10 = vsyncpa [#allocation3], 0
    // Predicated region
    $region2: #{tpu_custom_call.1} parent=1 // pred_check
      _
    $region3: #{tpu_custom_call.1} parent=1 // pred_check_branch
      %12 = sbr.rel (0) target = $region5
    $region4: #{tpu_custom_call.1} parent=1 // pred_region
      _
    $region5: #{tpu_custom_call.1} parent=1 // pred_fallthru
      _
    // Predicated region
    $region6: #{tpu_custom_call.1} parent=1 // pred_check
      _
    $region7: #{tpu_custom_call.1} parent=1 // pred_check_branch
      %14 = sbr.rel (0) target = $region9
    $region8: #{tpu_custom_call.1} parent=1 // pred_region
      _
    $region9: #{tpu_custom_call.1} parent=1 // pred_fallthru
      _
    // Predicated region
    $region10: #{tpu_custom_call.1} parent=1 // pred_check
      _
    $region11: #{tpu_custom_call.1} parent=1 // pred_check_branch
      %16 = sbr.rel (0) target = $region13
    $region12: #{tpu_custom_call.1} parent=1 // pred_region
      _
    $region13: #{tpu_custom_call.1} parent=1 // pred_fallthru
      _
    // Predicated region
    $region14: #{tpu_custom_call.1} parent=1 // pred_check
      _
    $region15: #{tpu_custom_call.1} parent=1 // pred_check_branch
      %18 = sbr.rel (0) target = $region17
    $region16: #{tpu_custom_call.1} parent=1 // pred_region
      _
    $region17: #{tpu_custom_call.1} parent=1 // pred_fallthru
      _
    // Predicated region
    $region18: #{tpu_custom_call.1} parent=1 // pred_check
      _
    $region19: #{tpu_custom_call.1} parent=1 // pred_check_branch
      %20 = sbr.rel (0) target = $region21
    $region20: #{tpu_custom_call.1} parent=1 // pred_region
      _
    $region21: #{tpu_custom_call.1} parent=1 // pred_fallthru
      _
    %v21 = vld [vmem:[%s1] sm:$0xff]
    %v22 = vld [vmem:[%s1 + $0x8] sm:$0xff]
    %v23 = vld [vmem:[%s1 + $0x10] sm:$0xff]
    %v24 = vld [vmem:[%s1 + $0x18] sm:$0xff]
    %v25 = vld [vmem:[%s0] sm:$0xff]
    %v26 = vld [vmem:[%s2] sm:$0xff]
    %v27 = vld [vmem:[%s2 + $0x8] sm:$0xff]
    %v28 = vld [vmem:[%s2 + $0x10] sm:$0xff]
    %v29 = vld [vmem:[%s2 + $0x18] sm:$0xff]
    %31 = vset.pattern.permute.xlu0 0
    %32 = vperm.xlu0 %31, %v26
    %v33 = vpop.permute.xlu0 %32
    %36 = vset.pattern.permute.xlu0 0
    %37 = vperm.xlu0 %36, %v27
    %v38 = vpop.permute.xlu0 %37
    %41 = vset.pattern.permute.xlu0 0
    %42 = vperm.xlu0 %41, %v28
    %v43 = vpop.permute.xlu0 %42
    %46 = vset.pattern.permute.xlu0 0
    %47 = vperm.xlu0 %46, %v29
    %v48 = vpop.permute.xlu0 %47
    %vm50 = vcmask 130048
    %v52 = vsel %vm50, %v21, 0
    %v55 = vsel %vm50, %v22, 0
    %v58 = vsel %vm50, %v23, 0
    %v61 = vsel %vm50, %v24, 0
    %v64 = vsel %vm50, %v25, 0
    %66 = vmatprep.subr.mxu0 0.0
    %67 = vmatpush1.xpose.msra.mxu0 0.0
    %68 = vmatprep.subr.mxu0 0.0
    %69 = vmatpush1.xpose.msra.mxu0 0.0
    %70 = vmatprep.subr.mxu0 0.0
    %71 = vmatpush1.xpose.msra.mxu0 0.0
    %72 = vmatprep.subr.mxu0 0.0
    %73 = vmatpush1.xpose.msra.mxu0 0.0
    %74 = vmatprep.subr.mxu0 0.0
    %75 = vmatpush1.xpose.msra.mxu0 0.0
    %76 = vmatprep.subr.mxu0 0.0
    %77 = vmatpush1.xpose.msra.mxu0 0.0
    %78 = vmatprep.subr.mxu0 0.0
    %79 = vmatpush1.xpose.msra.mxu0 0.0
    %80 = vmatprep.subr.mxu0 0.0
    %81 = vmatpush1.xpose.msra.mxu0 0.0
    %82 = vmatprep.subr.mxu0 0.0
    %83 = vmatpush1.xpose.msra.mxu0 0.0
    %84 = vmatprep.subr.mxu0 0.0
    %85 = vmatpush1.xpose.msra.mxu0 0.0
    %86 = vmatprep.subr.mxu0 0.0
    %87 = vmatpush1.xpose.msra.mxu0 0.0
    %88 = vmatprep.subr.mxu0 0.0
    %89 = vmatpush1.xpose.msra.mxu0 0.0
    %90 = vmatprep.subr.mxu0 0.0
    %91 = vmatpush1.xpose.msra.mxu0 0.0
    %92 = vmatprep.subr.mxu0 0.0
    %93 = vmatpush1.xpose.msra.mxu0 0.0
    %94 = vmatprep.subr.mxu0 0.0
    %95 = vmatpush1.xpose.msra.mxu0 0.0
    %96 = vmatprep.subr.mxu0 0.0
    %97 = vmatpush1.xpose.msra.mxu0 %v64
    %98 = vmatprep.subr.mxu0 0.0
    %99 = vmatpush2.xpose.msra.mxu0 0.0
    %100 = vmatprep.subr.mxu0 0.0
    %101 = vmatpush2.xpose.msra.mxu0 0.0
    %102 = vmatprep.subr.mxu0 0.0
    %103 = vmatpush2.xpose.msra.mxu0 0.0
    %104 = vmatprep.subr.mxu0 0.0
    %105 = vmatpush2.xpose.msra.mxu0 0.0
    %106 = vmatprep.subr.mxu0 0.0
    %107 = vmatpush2.xpose.msra.mxu0 0.0
    %108 = vmatprep.subr.mxu0 0.0
    %109 = vmatpush2.xpose.msra.mxu0 0.0
    %110 = vmatprep.subr.mxu0 0.0
    %111 = vmatpush2.xpose.msra.mxu0 0.0
    %112 = vmatprep.subr.mxu0 0.0
    %113 = vmatpush2.xpose.msra.mxu0 0.0
    %114 = vmatprep.subr.mxu0 0.0
    %115 = vmatpush2.xpose.msra.mxu0 0.0
    %116 = vmatprep.subr.mxu0 0.0
    %117 = vmatpush2.xpose.msra.mxu0 0.0
    %118 = vmatprep.subr.mxu0 0.0
    %119 = vmatpush2.xpose.msra.mxu0 0.0
    %120 = vmatprep.subr.mxu0 0.0
    %121 = vmatpush2.xpose.msra.mxu0 0.0
    %122 = vmatprep.subr.mxu0 0.0
    %123 = vmatpush2.xpose.msra.mxu0 0.0
    %124 = vmatprep.subr.mxu0 0.0
    %125 = vmatpush2.xpose.msra.mxu0 0.0
    %126 = vmatprep.subr.mxu0 0.0
    %127 = vmatpush2.xpose.msra.mxu0 0.0
    %128 = vmatprep.subr.mxu0 0.0
    %129 = vmatpush2.xpose.msra.mxu0 0.0
    %130 = vmatprep.mubr.f32.mxu0 0.0
    %131 = vmatmul.mubr.f32.gmra.mxu0 %v52
    %v132 = vpop.f32.mrf.mxu0
    %v133 = vadd.f32 %v33, %v132
    %v134 = vpop.f32.mrf.mxu0
    %135 = vmatprep.mubr.f32.mxu0 0.0
    %136 = vmatmul.mubr.f32.gmra.mxu0 %v55
    %v137 = vpop.f32.mrf.mxu0
    %v138 = vadd.f32 %v38, %v137
    %v139 = vpop.f32.mrf.mxu0
    %140 = vmatprep.mubr.f32.mxu0 0.0
    %141 = vmatmul.mubr.f32.gmra.mxu0 %v58
    %v142 = vpop.f32.mrf.mxu0
    %v143 = vadd.f32 %v43, %v142
    %v144 = vpop.f32.mrf.mxu0
    %145 = vmatprep.mubr.f32.mxu0 0.0
    %146 = vmatmul.mubr.f32.gmra.mxu0 %v61
    %v147 = vpop.f32.mrf.mxu0
    %v148 = vadd.f32 %v48, %v147
    %v149 = vpop.f32.mrf.mxu0
    %150 = vdwg.mxu0
    %v151 = vmax.f32 %v133, 0.0
    %v152 = vmax.f32 %v138, 0.0
    %v153 = vmax.f32 %v143, 0.0
    %v154 = vmax.f32 %v148, 0.0
    %v155 = vld [vmem:[%s3] sm:$0xff]
    %v156 = vld [vmem:[%s4] sm:$0xff]
    %158 = vset.pattern.permute.xlu0 0
    %159 = vperm.xlu0 %158, %v156
    %v160 = vpop.permute.xlu0 %159
    %vm162 = vcmask 261120
    %v164 = vsel %vm162, %v155, 0
    %166 = vmatprep.subr.mxu0 0.0
    %167 = vmatpush1.msra.mxu0 0.0
    %168 = vmatprep.subr.mxu0 0.0
    %169 = vmatpush1.msra.mxu0 0.0
    %170 = vmatprep.subr.mxu0 0.0
    %171 = vmatpush1.msra.mxu0 0.0
    %172 = vmatprep.subr.mxu0 0.0
    %173 = vmatpush1.msra.mxu0 0.0
    %174 = vmatprep.subr.mxu0 0.0
    %175 = vmatpush1.msra.mxu0 0.0
    %176 = vmatprep.subr.mxu0 0.0
    %177 = vmatpush1.msra.mxu0 0.0
    %178 = vmatprep.subr.mxu0 0.0
    %179 = vmatpush1.msra.mxu0 0.0
    %180 = vmatprep.subr.mxu0 0.0
    %181 = vmatpush1.msra.mxu0 0.0
    %182 = vmatprep.subr.mxu0 0.0
    %183 = vmatpush1.msra.mxu0 0.0
    %184 = vmatprep.subr.mxu0 0.0
    %185 = vmatpush1.msra.mxu0 0.0
    %186 = vmatprep.subr.mxu0 0.0
    %187 = vmatpush1.msra.mxu0 0.0
    %188 = vmatprep.subr.mxu0 0.0
    %189 = vmatpush1.msra.mxu0 0.0
    %190 = vmatprep.subr.mxu0 0.0
    %191 = vmatpush1.msra.mxu0 %v154
    %192 = vmatprep.subr.mxu0 0.0
    %193 = vmatpush1.msra.mxu0 %v153
    %194 = vmatprep.subr.mxu0 0.0
    %195 = vmatpush1.msra.mxu0 %v152
    %196 = vmatprep.subr.mxu0 0.0
    %197 = vmatpush1.msra.mxu0 %v151
    %198 = vmatprep.subr.mxu0 0.0
    %199 = vmatpush2.msra.mxu0 0.0
    %200 = vmatprep.subr.mxu0 0.0
    %201 = vmatpush2.msra.mxu0 0.0
    %202 = vmatprep.subr.mxu0 0.0
    %203 = vmatpush2.msra.mxu0 0.0
    %204 = vmatprep.subr.mxu0 0.0
    %205 = vmatpush2.msra.mxu0 0.0
    %206 = vmatprep.subr.mxu0 0.0
    %207 = vmatpush2.msra.mxu0 0.0
    %208 = vmatprep.subr.mxu0 0.0
    %209 = vmatpush2.msra.mxu0 0.0
    %210 = vmatprep.subr.mxu0 0.0
    %211 = vmatpush2.msra.mxu0 0.0
    %212 = vmatprep.subr.mxu0 0.0
    %213 = vmatpush2.msra.mxu0 0.0
    %214 = vmatprep.subr.mxu0 0.0
    %215 = vmatpush2.msra.mxu0 0.0
    %216 = vmatprep.subr.mxu0 0.0
    %217 = vmatpush2.msra.mxu0 0.0
    %218 = vmatprep.subr.mxu0 0.0
    %219 = vmatpush2.msra.mxu0 0.0
    %220 = vmatprep.subr.mxu0 0.0
    %221 = vmatpush2.msra.mxu0 0.0
    %222 = vmatprep.subr.mxu0 0.0
    %223 = vmatpush2.msra.mxu0 0.0
    %224 = vmatprep.subr.mxu0 0.0
    %225 = vmatpush2.msra.mxu0 0.0
    %226 = vmatprep.subr.mxu0 0.0
    %227 = vmatpush2.msra.mxu0 0.0
    %228 = vmatprep.subr.mxu0 0.0
    %229 = vmatpush2.msra.mxu0 0.0
    %230 = vmatprep.mubr.f32.mxu0 0.0
    %231 = vmatmul.mubr.f32.gmra.mxu0 %v164
    %v232 = vpop.f32.mrf.mxu0
    %v233 = vadd.f32 %v160, %v232
    %v234 = vpop.f32.mrf.mxu0
    %235 = vdwg.mxu0
    %vm236 = vcmask 64512
    %v237 = vsel %vm236, %v233, -inf
    %v238 = vrot.slane %v237, 4
    %v239 = vmax.f32 %v237, %v238
    %v240 = vrot.slane %v239, 2
    %v241 = vmax.f32 %v239, %v240
    %v242 = vrot.slane %v241, 1
    %v243 = vmax.f32 %v241, %v242
    %v244 = vsub.f32 %v233, %v243
    %v245 = vmul.f32 %v244, 1.442695
    %v246 = vpow.pop %v245
    %v247 = vsel %vm236, %v246, 0.0
    %v248 = vrot.slane %v247, 4
    %v249 = vadd.f32 %v247, %v248
    %v250 = vrot.slane %v249, 2
    %v251 = vadd.f32 %v249, %v250
    %v252 = vrot.slane %v251, 1
    %v253 = vadd.f32 %v251, %v252
    %v254 = vrcp.pop %v253
    %v255 = vmul.f32 %v246, %v254
    %256 = vst.msk [vmem:[#allocation2] sm:$0xff] %vm236, %v255
    // Predicated region
    $region22: #{tpu_custom_call.1} parent=1 // pred_check
      _
    $region23: #{tpu_custom_call.1} parent=1 // pred_check_branch
      %258 = sbr.rel (0) target = $region25
    $region24: #{tpu_custom_call.1} parent=1 // pred_region
      %s260 = ssub.s32 128, 128
      %261 = vsyncadd [#allocation3], %s260
      %s263 = sshll.u32 [#allocation2], 4
      %s264 = int_to_ptr.vmem [resolvable:$true] %s263
      %266 = dma.vmem_to_hbm [thread:$0]  %s264, 128, %s5, [#allocation3]
    $region25: #{tpu_custom_call.1} parent=1 // pred_fallthru
      _
    // Predicated region
    $region26: #{tpu_custom_call.1} parent=1 // pred_check
      _
    $region27: #{tpu_custom_call.1} parent=1 // pred_check_branch
      %268 = sbr.rel (0) target = $region29
    $region28: #{tpu_custom_call.1} parent=1 // pred_region
      %269 = dma.done [#allocation3], 128
    $region29: #{tpu_custom_call.1} parent=1 // pred_fallthru
      _
    %270 = vsyncpa [#allocation3], 1

</llo_original>
